<compile_context>
chip_gen: v5e
topology: v5e:2x2
jax: 0.10.0
libtpu: 0.0.40
codegen_flags: <defaults>
</compile_context>

<pallas_src>
import jax
import jax.numpy as jnp
from jax.experimental import pallas as pl
from jax.experimental.pallas import tpu as pltpu


def _round_up(x, m):
    return ((x + m - 1) // m) * m


def _cdiv(a, b):
    return -(-a // b)


def _lane_pad(n):
    return _round_up(max(int(n), 1), 128)


def _chip_profile():
    """Return (per-tile VMEM budget in bytes, #TensorCores per chip)."""
    try:
        kind = jax.devices()[0].device_kind.lower()
    except Exception:
        kind = ""
    if "v7" in kind or "7x" in kind:
        # v7x: 64 MiB physical VMEM (32 MiB default scoped), 2 TensorCores.
        return 24 * 1024 * 1024, 2
    # v5e / v6e (and older): 128 MiB VMEM, 1 TensorCore -> be generous.
    return 48 * 1024 * 1024, 1


def policy_kernel(x_ref, w1_ref, b1_ref, w2_ref, b2_ref, w3_ref, b3_ref,
                  mean_ref):
    """Fused MLP for one batch tile: two (Linear -> tanh) blocks + mean head.

    Matmuls hit the MXU with f32 accumulation; tanh goes to the EUP; bias adds
    are VPU elementwise. h1/h2 stay in vregs/VMEM (never touch HBM).
    """
    x = x_ref[...]                                               # (TB, obs)
    h1 = jnp.tanh(
        jnp.dot(x, w1_ref[...], preferred_element_type=jnp.float32)
        + b1_ref[...])                                           # (TB, hidden)
    h2 = jnp.tanh(
        jnp.dot(h1, w2_ref[...], preferred_element_type=jnp.float32)
        + b2_ref[...])                                           # (TB, hidden)
    mean_ref[...] = (
        jnp.dot(h2, w3_ref[...], preferred_element_type=jnp.float32)
        + b3_ref[...])                                           # (TB, ac)


def policy_forward(state, params, *, max_tb=None):
    """state: (B, obs) float32.  Returns (mean (B, ac), std (ac,))."""
    w1, b1, w2, b2, w3, b3, log_std = params
    B, obs = state.shape
    hidden = w1.shape[1]
    ac = w3.shape[1]

    budget, n_cores = _chip_profile()

    # Real (lane-padded) per-row VMEM footprint: state & mean double-buffered,
    # h1/h2 activations once each.  ~3 KiB/row at obs=16, hidden=64, ac=4.
    per_row = 4 * (2 * _lane_pad(obs) + 2 * _lane_pad(hidden) + 2 * _lane_pad(ac))
    # Weights/biases, double-buffered (constant-index BlockSpecs), with
    # sublane/lane padding.  ~150 KiB at hidden=64.
    weights_bytes = 2 * 4 * (
        _round_up(obs, 8) * _lane_pad(hidden)
        + _round_up(hidden, 8) * _lane_pad(hidden)
        + _round_up(hidden, 8) * _lane_pad(ac)
        + 8 * (2 * _lane_pad(hidden) + _lane_pad(ac)))

    if max_tb is None:
        # Largest tile that fits the generation's VMEM budget (8192 on v7x,
        # 16384 on v5e/v6e at hidden=64); re-derives automatically if the MLP
        # is ever scaled up.
        max_tb = max(8, ((budget - weights_bytes) // per_row) // 8 * 8)
        max_tb = min(max_tb, 16384)
    max_tb = max(8, (int(max_tb) // 8) * 8)

    # Tile policy: pick tile count first, then balance tiles; waste < 8 rows
    # per tile of compute, zero extra HBM traffic (partial-block DMA).
    num_tiles = _cdiv(B, max_tb)
    if n_cores >= 2 and B >= 4096:
        # Give both v7x TensorCores balanced work.
        num_tiles = max(num_tiles, 2)
        if num_tiles % 2:
            num_tiles += 1
    tb = _round_up(_cdiv(B, num_tiles), 8)
    if num_tiles == 1:
        # Single tile: use the exact batch as the block (full-array block, no
        # (8,128) constraint, no masked edge).  Typical RL batch sizes land
        # here on v5e/v6e -> no sequential grid-loop overhead at all.
        tb = B

    rows = num_tiles * tb  # rows actually computed (>= B by < 8*num_tiles)
    flops = 2 * rows * (obs * hidden + hidden * hidden + hidden * ac)
    transcendentals = 2 * rows * hidden  # two tanh layers
    bytes_accessed = 4 * (
        B * obs                                            # state in
        + obs * hidden + hidden * hidden + hidden * ac     # weights
        + 2 * hidden + ac                                   # biases
        + B * ac)                                           # mean out

    vmem_need = tb * per_row + weights_bytes + (2 << 20)
    vmem_limit = int(max(16 << 20,
                         min(_round_up(vmem_need, 1 << 20), budget + (8 << 20))))

    mean = pl.pallas_call(
        policy_kernel,
        out_shape=jax.ShapeDtypeStruct((B, ac), jnp.float32),
        grid=(num_tiles,),
        in_specs=[
            # Only O(B) input: tiled along the batch, pipelined/double-buffered.
            pl.BlockSpec((tb, obs), lambda i: (i, 0)),
            # Weights / biases: constant block index -> stay resident in VMEM.
            pl.BlockSpec((obs, hidden), lambda i: (0, 0)),
            pl.BlockSpec((1, hidden), lambda i: (0, 0)),
            pl.BlockSpec((hidden, hidden), lambda i: (0, 0)),
            pl.BlockSpec((1, hidden), lambda i: (0, 0)),
            pl.BlockSpec((hidden, ac), lambda i: (0, 0)),
            pl.BlockSpec((1, ac), lambda i: (0, 0)),
        ],
        out_specs=pl.BlockSpec((tb, ac), lambda i: (i, 0)),
        compiler_params=pltpu.CompilerParams(
            # Batch tiles are independent -> megacore sharding on v7x (2 TCs);
            # harmless no-op on v5e/v6e (1 TC).
            dimension_semantics=("parallel",),
            vmem_limit_bytes=vmem_limit,
        ),
        cost_estimate=pl.CostEstimate(
            flops=int(flops),
            transcendentals=int(transcendentals),
            bytes_accessed=int(bytes_accessed),
        ),
    )(state, w1, b1, w2, b2, w3, b3)

    # std is state-independent: compute once outside the kernel.
    std = jnp.exp(log_std)
    return mean, std


def init_params(key, obs, ac, hidden=64):
    """Deterministic init mimicking nn.Linear's U(-1/sqrt(fan_in), 1/sqrt(fan_in))."""
    ks = jax.random.split(key, 6)

    def lin(kw, kb, fan_in, fan_out):
        bound = 1.0 / jnp.sqrt(fan_in)
        w = jax.random.uniform(kw, (fan_in, fan_out), jnp.float32, -bound, bound)
        b = jax.random.uniform(kb, (1, fan_out), jnp.float32, -bound, bound)
        return w, b

    w1, b1 = lin(ks[0], ks[1], obs, hidden)
    w2, b2 = lin(ks[2], ks[3], hidden, hidden)
    w3, b3 = lin(ks[4], ks[5], hidden, ac)
    log_std = jnp.zeros((ac,), jnp.float32)   # nn.Parameter(torch.zeros(ac))
    return (w1, b1, w2, b2, w3, b3, log_std)


def _reference(state, params):
    w1, b1, w2, b2, w3, b3, log_std = params
    h = jnp.tanh(state @ w1 + b1)
    h = jnp.tanh(h @ w2 + b2)
    return h @ w3 + b3, jnp.exp(log_std)


if __name__ == "__main__":
    obs, ac, hidden = 16, 4, 64

    key = jax.random.PRNGKey(0)
    k_params, k_state = jax.random.split(key)
    params = init_params(k_params, obs, ac, hidden)

    # Case 1: batch multiple of 8, single tile.
    state8 = jax.random.normal(k_state, (8, obs), jnp.float32)
    mean8, std8 = policy_forward(state8, params)
    jax.block_until_ready((mean8, std8))
    mean8_ref, std8_ref = _reference(state8, params)
    assert mean8.shape == (8, ac) and std8.shape == (ac,)
    assert jnp.allclose(mean8, mean8_ref, atol=1e-5), "mean mismatch (B=8)"
    assert jnp.allclose(std8, std8_ref, atol=1e-6), "std mismatch (B=8)"

    # Case 2: ragged batch, single full-array tile (no padding, no copy).
    state13 = jax.random.normal(jax.random.PRNGKey(1), (13, obs), jnp.float32)
    mean13, std13 = policy_forward(state13, params)
    jax.block_until_ready((mean13, std13))
    mean13_ref, std13_ref = _reference(state13, params)
    assert mean13.shape == (13, ac) and std13.shape == (ac,)
    assert jnp.allclose(mean13, mean13_ref, atol=1e-5), "mean mismatch (B=13)"
    assert jnp.allclose(std13, std13_ref, atol=1e-6), "std mismatch (B=13)"

    # Case 3: force multiple tiles with a ragged last block (exercises the
    # partial-block DMA path used for large batches).
    mean13b, std13b = policy_forward(state13, params, max_tb=8)
    jax.block_until_ready((mean13b, std13b))
    assert mean13b.shape == (13, ac)
    assert jnp.allclose(mean13b, mean13_ref, atol=1e-5), "mean mismatch (tiled B=13)"
    assert jnp.allclose(std13b, std13_ref, atol=1e-6), "std mismatch (tiled B=13)"

    print("KERNEL_OK")
</pallas_src>

<mosaic_0001>
module attributes {stable_mosaic.version = 11 : i64} {
  func.func @policy_kernel(%arg0: i32, %arg1: memref<8x16xf32, #tpu.memory_space<vmem>>, %arg2: memref<16x64xf32, #tpu.memory_space<vmem>>, %arg3: memref<1x64xf32, #tpu.memory_space<vmem>>, %arg4: memref<64x64xf32, #tpu.memory_space<vmem>>, %arg5: memref<1x64xf32, #tpu.memory_space<vmem>>, %arg6: memref<64x4xf32, #tpu.memory_space<vmem>>, %arg7: memref<1x4xf32, #tpu.memory_space<vmem>>, %arg8: memref<8x4xf32, #tpu.memory_space<vmem>>) attributes {dimension_semantics = [#tpu.dimension_semantics<parallel>], iteration_bounds = array<i64: 1>, scalar_prefetch = 0 : i64, scratch_operands = 0 : i64, tpu.core_type = #tpu.core_type<tc>, window_params = [{transform_indices = @transform_0, window_bounds = array<i64: 8, 16>}, {pipeline_mode = #tpu.pipeline_mode<synchronous>, transform_indices = @transform_1, window_bounds = array<i64: 16, 64>}, {pipeline_mode = #tpu.pipeline_mode<synchronous>, transform_indices = @transform_2, window_bounds = array<i64: 1, 64>}, {pipeline_mode = #tpu.pipeline_mode<synchronous>, transform_indices = @transform_3, window_bounds = array<i64: 64, 64>}, {pipeline_mode = #tpu.pipeline_mode<synchronous>, transform_indices = @transform_4, window_bounds = array<i64: 1, 64>}, {pipeline_mode = #tpu.pipeline_mode<synchronous>, transform_indices = @transform_5, window_bounds = array<i64: 64, 4>}, {pipeline_mode = #tpu.pipeline_mode<synchronous>, transform_indices = @transform_6, window_bounds = array<i64: 1, 4>}, {transform_indices = @transform_7, window_bounds = array<i64: 8, 4>}]} {
    %c0 = arith.constant 0 : index
    %c0_0 = arith.constant 0 : index
    %0 = vector.load %arg1[%c0, %c0_0] : memref<8x16xf32, #tpu.memory_space<vmem>>, vector<8x16xf32>
    %c0_1 = arith.constant 0 : index
    %c0_2 = arith.constant 0 : index
    %1 = vector.load %arg2[%c0_1, %c0_2] : memref<16x64xf32, #tpu.memory_space<vmem>>, vector<16x64xf32>
    %cst = arith.constant dense<0.000000e+00> : vector<8x64xf32>
    %2 = tpu.matmul %0, %1, %cst {dimension_numbers = #tpu.dot_dimension_numbers<[1], [0], [0], [1], [0, 0, 1, 1], [], []>} : vector<8x16xf32>, vector<16x64xf32>, vector<8x64xf32> -> vector<8x64xf32>
    %c0_3 = arith.constant 0 : index
    %c0_4 = arith.constant 0 : index
    %3 = vector.load %arg3[%c0_3, %c0_4] : memref<1x64xf32, #tpu.memory_space<vmem>>, vector<1x64xf32>
    %4 = vector.broadcast %3 : vector<1x64xf32> to vector<8x64xf32>
    %5 = arith.addf %2, %4 : vector<8x64xf32>
    %6 = math.tanh %5 : vector<8x64xf32>
    %c0_5 = arith.constant 0 : index
    %c0_6 = arith.constant 0 : index
    %7 = vector.load %arg4[%c0_5, %c0_6] : memref<64x64xf32, #tpu.memory_space<vmem>>, vector<64x64xf32>
    %cst_7 = arith.constant dense<0.000000e+00> : vector<8x64xf32>
    %8 = tpu.matmul %6, %7, %cst_7 {dimension_numbers = #tpu.dot_dimension_numbers<[1], [0], [0], [1], [0, 0, 1, 1], [], []>} : vector<8x64xf32>, vector<64x64xf32>, vector<8x64xf32> -> vector<8x64xf32>
    %c0_8 = arith.constant 0 : index
    %c0_9 = arith.constant 0 : index
    %9 = vector.load %arg5[%c0_8, %c0_9] : memref<1x64xf32, #tpu.memory_space<vmem>>, vector<1x64xf32>
    %10 = vector.broadcast %9 : vector<1x64xf32> to vector<8x64xf32>
    %11 = arith.addf %8, %10 : vector<8x64xf32>
    %12 = math.tanh %11 : vector<8x64xf32>
    %c0_10 = arith.constant 0 : index
    %c0_11 = arith.constant 0 : index
    %13 = vector.load %arg6[%c0_10, %c0_11] : memref<64x4xf32, #tpu.memory_space<vmem>>, vector<64x4xf32>
    %cst_12 = arith.constant dense<0.000000e+00> : vector<8x4xf32>
    %14 = tpu.matmul %12, %13, %cst_12 {dimension_numbers = #tpu.dot_dimension_numbers<[1], [0], [0], [1], [0, 0, 1, 1], [], []>} : vector<8x64xf32>, vector<64x4xf32>, vector<8x4xf32> -> vector<8x4xf32>
    %c0_13 = arith.constant 0 : index
    %c0_14 = arith.constant 0 : index
    %15 = vector.load %arg7[%c0_13, %c0_14] : memref<1x4xf32, #tpu.memory_space<vmem>>, vector<1x4xf32>
    %16 = vector.broadcast %15 : vector<1x4xf32> to vector<8x4xf32>
    %17 = arith.addf %14, %16 : vector<8x4xf32>
    %c0_15 = arith.constant 0 : index
    %c0_16 = arith.constant 0 : index
    %18 = vector.load %arg8[%c0_15, %c0_16] : memref<8x4xf32, #tpu.memory_space<vmem>>, vector<8x4xf32>
    tpu.vector_store %arg8[%c0_15, %c0_16], %17 {strides = array<i32>} : memref<8x4xf32, #tpu.memory_space<vmem>>, vector<8x4xf32>,
    return
  }
  func.func @transform_0(%arg0: i32) -> (i32, i32) {
    %c0_i32 = arith.constant 0 : i32
    %c0_i32_0 = arith.constant 0 : i32
    return %arg0, %c0_i32 : i32, i32
  }
  func.func @transform_1(%arg0: i32) -> (i32, i32) {
    %c0_i32 = arith.constant 0 : i32
    %c0_i32_0 = arith.constant 0 : i32
    %c0_i32_1 = arith.constant 0 : i32
    return %c0_i32, %c0_i32_0 : i32, i32
  }
  func.func @transform_2(%arg0: i32) -> (i32, i32) {
    %c0_i32 = arith.constant 0 : i32
    %c0_i32_0 = arith.constant 0 : i32
    %c0_i32_1 = arith.constant 0 : i32
    return %c0_i32, %c0_i32_0 : i32, i32
  }
  func.func @transform_3(%arg0: i32) -> (i32, i32) {
    %c0_i32 = arith.constant 0 : i32
    %c0_i32_0 = arith.constant 0 : i32
    %c0_i32_1 = arith.constant 0 : i32
    return %c0_i32, %c0_i32_0 : i32, i32
  }
  func.func @transform_4(%arg0: i32) -> (i32, i32) {
    %c0_i32 = arith.constant 0 : i32
    %c0_i32_0 = arith.constant 0 : i32
    %c0_i32_1 = arith.constant 0 : i32
    return %c0_i32, %c0_i32_0 : i32, i32
  }
  func.func @transform_5(%arg0: i32) -> (i32, i32) {
    %c0_i32 = arith.constant 0 : i32
    %c0_i32_0 = arith.constant 0 : i32
    %c0_i32_1 = arith.constant 0 : i32
    return %c0_i32, %c0_i32_0 : i32, i32
  }
  func.func @transform_6(%arg0: i32) -> (i32, i32) {
    %c0_i32 = arith.constant 0 : i32
    %c0_i32_0 = arith.constant 0 : i32
    %c0_i32_1 = arith.constant 0 : i32
    return %c0_i32, %c0_i32_0 : i32, i32
  }
  func.func @transform_7(%arg0: i32) -> (i32, i32) {
    %c0_i32 = arith.constant 0 : i32
    %c0_i32_0 = arith.constant 0 : i32
    return %arg0, %c0_i32 : i32, i32
  }
}

</mosaic_0001>

<llo_original>
// kernel: tpu_custom_call.1
$region0: #{tpu_custom_call.1}
  #allocation0 [shape = 'u32[]', space=smem, size = 0x4, offset = 0x4, fixed_abs, tag = 'smem constant byte address 0x4 - core index']
  #allocation1 [shape = 'u32[72,128]{1,0:T(1,128)}', space=vmem, size = 0x9000, scoped, tag = 'internal scratch']
  %s0 = inlined_call_operand.hbm [shape: f32[8,16], index: 0, kind: input, shape index: {}]
  %s1 = inlined_call_operand.hbm [shape: f32[16,64], index: 1, kind: input, shape index: {}]
  %s2 = inlined_call_operand.vmem [shape: f32[1,64], index: 2, kind: input, shape index: {}]
  %s3 = inlined_call_operand.vmem [shape: f32[64,64], index: 3, kind: input, shape index: {}]
  %s4 = inlined_call_operand.vmem [shape: f32[1,64], index: 4, kind: input, shape index: {}]
  %s5 = inlined_call_operand.vmem [shape: f32[64,4], index: 5, kind: input, shape index: {}]
  %s6 = inlined_call_operand.vmem [shape: f32[1,4], index: 6, kind: input, shape index: {}]
  %s7 = inlined_call_operand.vmem [shape: f32[8,4], index: 7, kind: output, shape index: {}]
  %s8 = sld [smem:[#allocation0]]
  $region46: #{tpu_custom_call.1} parent=0
    _
  %s10 = ssub.s32 1, %s8
  %s11 = scalar_select 0, %s10, %s8
  $region1: #{tpu_custom_call.1} parent=0
    #allocation2 [shape = 'u8[4096]{0}', space=vmem, size = 0x1000, scoped, tag = 'input window, operand 0, single buffered']
    #allocation3 [shape = 's32[1]{0}', space=sflag, size = 0x4, scoped, tag = 'scoped memory for tpu_custom_call.1']
    #allocation4 [shape = 'u8[8192]{0}', space=vmem, size = 0x2000, scoped, tag = 'input window, operand 1, single buffered']
    #allocation5 [shape = 's32[1]{0}', space=sflag, size = 0x4, scoped, tag = 'scoped memory for tpu_custom_call.1']
    %12 = vsyncpa [#allocation3], 0
    %13 = vsyncpa [#allocation5], 0
    // Predicated region
    $region2: #{tpu_custom_call.1} parent=1 // pred_check
      _
    $region3: #{tpu_custom_call.1} parent=1 // pred_check_branch
      %15 = sbr.rel (0) target = $region5
    $region4: #{tpu_custom_call.1} parent=1 // pred_region
      %17 = vsyncadd [#allocation3], 0
      %s19 = sshll.u32 %s0, 4
      %s20 = int_to_ptr.hbm [resolvable:$true] %s19
      %s21 = sshll.u32 [#allocation2], 4
      %s22 = int_to_ptr.vmem [resolvable:$true] %s21
      %24 = dma.hbm_to_vmem [thread:$0]  %s20, 128, %s22, [#allocation3]
    $region5: #{tpu_custom_call.1} parent=1 // pred_fallthru
      _
    // Predicated region
    $region6: #{tpu_custom_call.1} parent=1 // pred_check
      _
    $region7: #{tpu_custom_call.1} parent=1 // pred_check_branch
      %26 = sbr.rel (0) target = $region9
    $region8: #{tpu_custom_call.1} parent=1 // pred_region
      %28 = vsyncadd [#allocation5], 0
      %s29 = sshll.u32 %s1, 4
      %s30 = int_to_ptr.hbm [resolvable:$true] %s29
      %s31 = sshll.u32 [#allocation4], 4
      %s32 = int_to_ptr.vmem [resolvable:$true] %s31
      %37 = dma.hbm_to_vmem [thread:$0]  %s30, 256, %s32, [#allocation5], 128, 128, 8
    $region9: #{tpu_custom_call.1} parent=1 // pred_fallthru
      _
    // Predicated region
    $region10: #{tpu_custom_call.1} parent=1 // pred_check
      _
    $region11: #{tpu_custom_call.1} parent=1 // pred_check_branch
      %39 = sbr.rel (0) target = $region13
    $region12: #{tpu_custom_call.1} parent=1 // pred_region
      _
    $region13: #{tpu_custom_call.1} parent=1 // pred_fallthru
      _
    // Predicated region
    $region14: #{tpu_custom_call.1} parent=1 // pred_check
      _
    $region15: #{tpu_custom_call.1} parent=1 // pred_check_branch
      %41 = sbr.rel (0) target = $region17
    $region16: #{tpu_custom_call.1} parent=1 // pred_region
      _
    $region17: #{tpu_custom_call.1} parent=1 // pred_fallthru
      _
    // Predicated region
    $region18: #{tpu_custom_call.1} parent=1 // pred_check
      _
    $region19: #{tpu_custom_call.1} parent=1 // pred_check_branch
      %43 = sbr.rel (0) target = $region21
    $region20: #{tpu_custom_call.1} parent=1 // pred_region
      _
    $region21: #{tpu_custom_call.1} parent=1 // pred_fallthru
      _
    // Predicated region
    $region22: #{tpu_custom_call.1} parent=1 // pred_check
      _
    $region23: #{tpu_custom_call.1} parent=1 // pred_check_branch
      %45 = sbr.rel (0) target = $region25
    $region24: #{tpu_custom_call.1} parent=1 // pred_region
      _
    $region25: #{tpu_custom_call.1} parent=1 // pred_fallthru
      _
    // Predicated region
    $region26: #{tpu_custom_call.1} parent=1 // pred_check
      _
    $region27: #{tpu_custom_call.1} parent=1 // pred_check_branch
      %47 = sbr.rel (0) target = $region29
    $region28: #{tpu_custom_call.1} parent=1 // pred_region
      _
    $region29: #{tpu_custom_call.1} parent=1 // pred_fallthru
      _
    // Predicated region
    $region30: #{tpu_custom_call.1} parent=1 // pred_check
      _
    $region31: #{tpu_custom_call.1} parent=1 // pred_check_branch
      %49 = sbr.rel (0) target = $region33
    $region32: #{tpu_custom_call.1} parent=1 // pred_region
      %51 = dma.done [#allocation3], 128
    $region33: #{tpu_custom_call.1} parent=1 // pred_fallthru
      _
    // Predicated region
    $region34: #{tpu_custom_call.1} parent=1 // pred_check
      _
    $region35: #{tpu_custom_call.1} parent=1 // pred_check_branch
      %53 = sbr.rel (0) target = $region37
    $region36: #{tpu_custom_call.1} parent=1 // pred_region
      %55 = dma.done [#allocation5], 256
    $region37: #{tpu_custom_call.1} parent=1 // pred_fallthru
      _
    %v56 = vld [vmem:[#allocation2] sm:$0xff]
    %v57 = vld [vmem:[#allocation4] sm:$0xff]
    %v58 = vld [vmem:[#allocation4 + $0x8] sm:$0xff]
    %v59 = vld [vmem:[%s2] sm:$0x1]
    %v61 = vperm.slane %v59, 0
    %vm63 = vcmask 130048
    %v65 = vsel %vm63, %v56, 0
    %67 = vmatpush.msra.mxu0 0.0
    %68 = vmatpush.msra.mxu0 0.0
    %69 = vmatpush.msra.mxu0 0.0
    %70 = vmatpush.msra.mxu0 0.0
    %71 = vmatpush.msra.mxu0 0.0
    %72 = vmatpush.msra.mxu0 0.0
    %73 = vmatpush.msra.mxu0 0.0
    %74 = vmatpush.msra.mxu0 0.0
    %75 = vmatpush.msra.mxu0 0.0
    %76 = vmatpush.msra.mxu0 0.0
    %77 = vmatpush.msra.mxu0 0.0
    %78 = vmatpush.msra.mxu0 0.0
    %79 = vmatpush.msra.mxu0 0.0
    %80 = vmatpush.msra.mxu0 0.0
    %81 = vmatpush.msra.mxu0 %v58
    %82 = vmatpush.msra.mxu0 %v57
    %83 = vmatmul.f32.gmra.mxu0 %v65
    %v84 = vpop.f32.mrf.mxu0
    %v85 = vadd.f32 %v61, %v84
    %86 = vdwg.mxu0
    %v87 = vtanh.pop %v85
    %v88 = vld [vmem:[%s3] sm:$0xff]
    %v89 = vld [vmem:[%s3 + $0x8] sm:$0xff]
    %v90 = vld [vmem:[%s3 + $0x10] sm:$0xff]
    %v91 = vld [vmem:[%s3 + $0x18] sm:$0xff]
    %v92 = vld [vmem:[%s3 + $0x20] sm:$0xff]
    %v93 = vld [vmem:[%s3 + $0x28] sm:$0xff]
    %v94 = vld [vmem:[%s3 + $0x30] sm:$0xff]
    %v95 = vld [vmem:[%s3 + $0x38] sm:$0xff]
    %v96 = vld [vmem:[%s4] sm:$0x1]
    %v98 = vperm.slane %v96, 0
    %vm100 = vcmask 523264
    %v102 = vsel %vm100, %v87, 0
    %104 = vmatpush.msra.mxu0 0.0
    %105 = vmatpush.msra.mxu0 0.0
    %106 = vmatpush.msra.mxu0 0.0
    %107 = vmatpush.msra.mxu0 0.0
    %108 = vmatpush.msra.mxu0 0.0
    %109 = vmatpush.msra.mxu0 0.0
    %110 = vmatpush.msra.mxu0 0.0
    %111 = vmatpush.msra.mxu0 0.0
    %112 = vmatpush.msra.mxu0 %v95
    %113 = vmatpush.msra.mxu0 %v94
    %114 = vmatpush.msra.mxu0 %v93
    %115 = vmatpush.msra.mxu0 %v92
    %116 = vmatpush.msra.mxu0 %v91
    %117 = vmatpush.msra.mxu0 %v90
    %118 = vmatpush.msra.mxu0 %v89
    %119 = vmatpush.msra.mxu0 %v88
    %120 = vmatmul.f32.gmra.mxu0 %v102
    %v121 = vpop.f32.mrf.mxu0
    %v122 = vadd.f32 %v98, %v121
    %123 = vdwg.mxu0
    %v124 = vtanh.pop %v122
    %v125 = vld [vmem:[%s5] sm:$0xff]
    %v126 = vld [vmem:[%s5 + $0x8] sm:$0xff]
    %v127 = vld [vmem:[%s5 + $0x10] sm:$0xff]
    %v128 = vld [vmem:[%s5 + $0x18] sm:$0xff]
    %v129 = vld [vmem:[%s5 + $0x20] sm:$0xff]
    %v130 = vld [vmem:[%s5 + $0x28] sm:$0xff]
    %v131 = vld [vmem:[%s5 + $0x30] sm:$0xff]
    %v132 = vld [vmem:[%s5 + $0x38] sm:$0xff]
    %v133 = vld [vmem:[%s6] sm:$0x1]
    %v135 = vperm.slane %v133, 0
    %v138 = vsel %vm100, %v124, 0
    %140 = vmatpush.msra.mxu0 0.0
    %141 = vmatpush.msra.mxu0 0.0
    %142 = vmatpush.msra.mxu0 0.0
    %143 = vmatpush.msra.mxu0 0.0
    %144 = vmatpush.msra.mxu0 0.0
    %145 = vmatpush.msra.mxu0 0.0
    %146 = vmatpush.msra.mxu0 0.0
    %147 = vmatpush.msra.mxu0 0.0
    %148 = vmatpush.msra.mxu0 %v132
    %149 = vmatpush.msra.mxu0 %v131
    %150 = vmatpush.msra.mxu0 %v130
    %151 = vmatpush.msra.mxu0 %v129
    %152 = vmatpush.msra.mxu0 %v128
    %153 = vmatpush.msra.mxu0 %v127
    %154 = vmatpush.msra.mxu0 %v126
    %155 = vmatpush.msra.mxu0 %v125
    %156 = vmatmul.f32.gmra.mxu0 %v138
    %v157 = vpop.f32.mrf.mxu0
    %v158 = vadd.f32 %v135, %v157
    %159 = vdwg.mxu0
    %vm160 = vcmask 31744
    %161 = vst.msk [vmem:[%s7] sm:$0xff] %vm160, %v158
    // Predicated region
    $region38: #{tpu_custom_call.1} parent=1 // pred_check
      _
    $region39: #{tpu_custom_call.1} parent=1 // pred_check_branch
      %163 = sbr.rel (0) target = $region41
    $region40: #{tpu_custom_call.1} parent=1 // pred_region
      _
    $region41: #{tpu_custom_call.1} parent=1 // pred_fallthru
      _
    // Predicated region
    $region42: #{tpu_custom_call.1} parent=1 // pred_check
      _
    $region43: #{tpu_custom_call.1} parent=1 // pred_check_branch
      %165 = sbr.rel (0) target = $region45
    $region44: #{tpu_custom_call.1} parent=1 // pred_region
      _
    $region45: #{tpu_custom_call.1} parent=1 // pred_fallthru
      _
    %166 = vsyncpa [#allocation3], 1
    %167 = vsyncpa [#allocation5], 1

</llo_original>
